<compile_context>
chip_gen: v7x
topology: tpu7x:2x2x1
jax: 0.10.0
libtpu: 0.0.40
codegen_flags: <defaults>
</compile_context>

<pallas_src>
import functools

import jax
import jax.numpy as jnp
from jax import lax
from jax.experimental import pallas as pl
from jax.experimental.pallas import tpu as pltpu


def _focal_ssd_kernel(anchors_ref, confs_ref, labels_ref, bbox_ref, gtb_ref,
                      part_ref, *, alpha, scale_xy, scale_wh, gamma,
                      n_batch, n_anchors, batch_tile, anchor_tile):
    b = pl.program_id(0)
    a = pl.program_id(1)

    # Tiles may overhang the batch / anchor extents (ragged tails); those
    # rows / lanes must not contribute.
    row_ids = b * batch_tile + lax.broadcasted_iota(
        jnp.int32, (batch_tile, 1), 0)
    col_ids = a * anchor_tile + lax.broadcasted_iota(
        jnp.int32, (1, anchor_tile), 1)
    valid = (row_ids < n_batch) & (col_ids < n_anchors)            # (bt, at)

    labels = labels_ref[...]                                       # (bt, at) i32
    num_classes = confs_ref.shape[1]

    # ---- classification: focal loss on the target class -------------------
    # Two short static passes over the class axis (running max, then
    # sum-exp + gather of the target-class logit and alpha).  Keeps live
    # temporaries to a few (bt, at) f32 slabs instead of several full
    # (bt, C, at) slabs (the main VMEM pressure flagged by the review).
    m = confs_ref[:, 0, :].astype(jnp.float32)                     # (bt, at)
    for c in range(1, num_classes):
        m = jnp.maximum(m, confs_ref[:, c, :].astype(jnp.float32))

    sum_exp = jnp.zeros_like(m)
    z_t = jnp.zeros_like(m)            # logit(target class) - max
    a_t = jnp.zeros_like(m)            # alpha[target class]
    for c in range(num_classes):
        zc = confs_ref[:, c, :].astype(jnp.float32) - m
        sum_exp = sum_exp + jnp.exp(zc)
        sel = labels == c
        z_t = jnp.where(sel, zc, z_t)
        a_t = jnp.where(sel, jnp.float32(alpha[c]), a_t)

    log_p_t = z_t - jnp.log(sum_exp)                               # log_softmax @ target
    p_t = jnp.exp(log_p_t)
    one_m_p = jnp.maximum(1.0 - p_t, 0.0)                          # guard p_t > 1 by 1 ulp
    focal_w = one_m_p * one_m_p if gamma == 2.0 else one_m_p ** gamma
    fl = -a_t * focal_w * log_p_t                                  # (bt, at)
    focal_part = jnp.sum(jnp.where(valid, fl, 0.0), axis=0, keepdims=True)

    # ---- regression: smooth-L1 on positive anchors -------------------------
    anchors = anchors_ref[...].astype(jnp.float32)                 # (4, at)
    loc = gtb_ref[...].astype(jnp.float32)                         # (bt, 4, at)
    delta = bbox_ref[...].astype(jnp.float32)                      # (bt, 4, at)

    pos = (labels > 0) & valid                                     # (bt, at)

    anc_xy = anchors[:2, :][None]                                  # (1, 2, at)
    anc_wh = anchors[2:, :][None]                                  # (1, 2, at)
    gxy = scale_xy * (loc[:, :2, :] - anc_xy) / anc_wh
    ratio_wh = loc[:, 2:, :] / anc_wh
    # Guard log(0)/log(junk) for negative / padded anchors before the math
    # (those anchors never contribute; PyTorch drops them via boolean gather).
    safe_ratio = jnp.where(pos[:, None, :], ratio_wh, 1.0)
    gwh = scale_wh * jnp.log(safe_ratio)

    def smooth_l1(d):
        ad = jnp.abs(d)
        return jnp.where(ad < 1.0, 0.5 * d * d, ad - 0.5)

    reg_anchor = (jnp.sum(smooth_l1(delta[:, :2, :] - gxy), axis=1) +
                  jnp.sum(smooth_l1(delta[:, 2:, :] - gwh), axis=1))   # (bt, at)
    reg_part = jnp.sum(jnp.where(pos, reg_anchor, 0.0), axis=0, keepdims=True)
    npos_part = jnp.sum(pos.astype(jnp.float32), axis=0, keepdims=True)

    # One lane-dense (1, 1, 3, at) partial block per grid step (full-lane
    # store, no read-modify-write); rows: focal, reg, num_pos.
    part_ref[...] = jnp.concatenate(
        [focal_part, reg_part, npos_part], axis=0)[None, None]


def _ceil_to(x, m):
    return -(-x // m) * m


def focal_loss_forward(bbox_delta, confs, gt_bbox, gt_labels,
                       anchors_xywh, alpha, scale_xy, scale_wh, gamma=2.0):
    """Mirrors FocalLoss.forward; returns (total_loss, to_log)."""
    N, C, A = confs.shape

    # alpha is a constructor constant in the PyTorch module -> bake it in as
    # static per-class weights (no SMEM table / extra input needed).
    alpha_t = tuple(float(v) for v in jax.device_get(
        jnp.asarray(alpha, jnp.float32)).reshape(-1))
    assert len(alpha_t) == C, "alpha must have one weight per class"

    # Layout glue only; all dtype casts happen inside the kernel.
    # TODO(synk): have the target encoder emit gt_bbox as [N, 4, A] so this
    # extra HBM read+write transpose pass disappears entirely.
    gt_bbox_t = jnp.transpose(gt_bbox, (0, 2, 1))                  # [N, 4, A]
    labels_i32 = gt_labels.astype(jnp.int32)                       # [N, A]
    anchors = jnp.asarray(anchors_xywh, jnp.float32).reshape(4, A)

    conf_isz = jnp.dtype(confs.dtype).itemsize
    bt = min(N, 8)

    def tile_bytes(at):
        # Double-buffered input/output blocks (sublane dims padded to 8) plus
        # a generous allowance for live f32 temporaries.
        return (2 * bt * _ceil_to(C, 8) * at * conf_isz     # confs
                + 2 * 2 * bt * 8 * at * 4                   # bbox_delta + gt_bbox
                + 2 * _ceil_to(bt, 8) * at * 4              # labels
                + 2 * 8 * at * 4                            # anchors
                + 2 * 8 * at * 4                            # partial outputs
                + 32 * bt * at * 4)                         # temporaries

    try:
        vmem_cap = int(pltpu.get_tpu_info().vmem_capacity_bytes)
    except Exception:
        vmem_cap = 64 * 1024 * 1024                          # v7x-safe fallback
    budget = vmem_cap // 3                                   # working-set target

    if A <= 128:
        at = A
    else:
        at = max(128, min((budget // tile_bytes(1)) // 128 * 128, 8192))
        if at >= A:
            at = A
            if N <= bt and A >= 256:
                # Split the anchor axis so the grid has >= 2 steps (keeps both
                # TensorCores busy on v7x; harmless on v5e / v6e).
                at = _ceil_to(-(-A // 2), 128)
    gb = pl.cdiv(N, bt)
    ga = pl.cdiv(A, at)

    vmem_limit = int(min(vmem_cap * 3 // 4,
                         max(2 * tile_bytes(at), 32 * 1024 * 1024)))

    kernel = functools.partial(
        _focal_ssd_kernel,
        alpha=alpha_t,
        scale_xy=float(scale_xy), scale_wh=float(scale_wh), gamma=float(gamma),
        n_batch=N, n_anchors=A, batch_tile=bt, anchor_tile=at)

    parts = pl.pallas_call(
        kernel,
        out_shape=jax.ShapeDtypeStruct((gb, ga, 3, at), jnp.float32),
        grid_spec=pltpu.PrefetchScalarGridSpec(
            num_scalar_prefetch=0,
            grid=(gb, ga),
            in_specs=[
                pl.BlockSpec((4, at), lambda b, a: (0, a)),           # anchors
                pl.BlockSpec((bt, C, at), lambda b, a: (b, 0, a)),    # confs
                pl.BlockSpec((bt, at), lambda b, a: (b, a)),          # labels
                pl.BlockSpec((bt, 4, at), lambda b, a: (b, 0, a)),    # bbox_delta
                pl.BlockSpec((bt, 4, at), lambda b, a: (b, 0, a)),    # gt_bbox [N,4,A]
            ],
            out_specs=pl.BlockSpec((1, 1, 3, at), lambda b, a: (b, a, 0, 0)),
        ),
        compiler_params=pltpu.CompilerParams(
            dimension_semantics=("parallel", "parallel"),
            vmem_limit_bytes=vmem_limit),
    )(anchors, confs, labels_i32, bbox_delta, gt_bbox_t)

    # Tiny final reductions (a few KB) in plain XLA.
    focal_sum = jnp.sum(parts[:, :, 0, :])
    reg_sum = jnp.sum(parts[:, :, 1, :])
    num_pos = jnp.sum(parts[:, :, 2, :])

    # PyTorch: focal tensor is (N, C, A); .sum(dim=1) -> (N, A); .mean()
    # over N*A elements == total_sum / (N * A).
    classification_loss = focal_sum / jnp.float32(N * A)
    # PyTorch: regression_loss / num_pos (0/0 -> NaN when a batch has no
    # positive anchors; reproduced exactly).
    regression_loss = reg_sum / num_pos
    total_loss = regression_loss + classification_loss
    to_log = dict(regression_loss=regression_loss,
                  classification_loss=classification_loss,
                  total_loss=total_loss)
    return total_loss, to_log


if __name__ == "__main__":
    N, C, A = 2, 9, 256   # batch, num_classes (alpha has 9 entries), num_anchors

    key = jax.random.PRNGKey(0)
    k1, k2, k3, k4, k5, k6, k7 = jax.random.split(key, 7)

    # anchors in xywh with positive widths / heights
    anc_xy = jax.random.uniform(k1, (2, A), minval=0.2, maxval=0.8)
    anc_wh = jax.random.uniform(k2, (2, A), minval=0.1, maxval=0.4)
    anchors_xywh = jnp.concatenate([anc_xy, anc_wh], axis=0)[None]   # [1, 4, A]
    alpha = jnp.arange(1, C + 1, dtype=jnp.float32) * 0.1            # 9 weights
    scale_xy = 10.0   # 1 / anchors.scale_xy (scale_xy = 0.1)
    scale_wh = 5.0    # 1 / anchors.scale_wh (scale_wh = 0.2)

    # forward inputs
    bbox_delta = jax.random.normal(k3, (N, 4, A), dtype=jnp.float32)
    confs = jax.random.normal(k4, (N, C, A), dtype=jnp.float32)
    gt_xy = jax.random.uniform(k5, (N, A, 2), minval=0.2, maxval=0.8)
    gt_wh = jax.random.uniform(k6, (N, A, 2), minval=0.1, maxval=0.4)
    gt_bbox = jnp.concatenate([gt_xy, gt_wh], axis=-1)               # [N, A, 4]
    gt_labels = jax.random.randint(k7, (N, A), 0, C, dtype=jnp.int32)

    total_loss, to_log = focal_loss_forward(
        bbox_delta, confs, gt_bbox, gt_labels,
        anchors_xywh, alpha, scale_xy, scale_wh)

    jax.block_until_ready(total_loss)
    print("KERNEL_OK")
</pallas_src>

<mosaic_0001>
module attributes {stable_mosaic.version = 11 : i64} {
  func.func @_focal_ssd_kernel(%arg0: i32, %arg1: i32, %arg2: memref<4x128xf32, #tpu.memory_space<vmem>>, %arg3: memref<2x9x128xf32, #tpu.memory_space<vmem>>, %arg4: memref<2x128xi32, #tpu.memory_space<vmem>>, %arg5: memref<2x4x128xf32, #tpu.memory_space<vmem>>, %arg6: memref<2x4x128xf32, #tpu.memory_space<vmem>>, %arg7: memref<1x1x3x128xf32, #tpu.memory_space<vmem>>) attributes {dimension_semantics = [#tpu.dimension_semantics<parallel>, #tpu.dimension_semantics<parallel>], iteration_bounds = array<i64: 1, 2>, scalar_prefetch = 0 : i64, scratch_operands = 0 : i64, tpu.core_type = #tpu.core_type<tc>, window_params = [{transform_indices = @transform_0, window_bounds = array<i64: 4, 128>}, {transform_indices = @transform_1, window_bounds = array<i64: 2, 9, 128>}, {transform_indices = @transform_2, window_bounds = array<i64: 2, 128>}, {transform_indices = @transform_3, window_bounds = array<i64: 2, 4, 128>}, {transform_indices = @transform_4, window_bounds = array<i64: 2, 4, 128>}, {transform_indices = @transform_5, window_bounds = array<i64: 1, 1, 3, 128>}]} {
    %c2_i32 = arith.constant 2 : i32
    %0 = arith.muli %arg0, %c2_i32 : i32
    %1 = tpu.iota {dimensions = array<i32: 0>} : vector<2x1xi32>
    %2 = vector.broadcast %0 : i32 to vector<2x1xi32>
    %3 = arith.addi %2, %1 : vector<2x1xi32>
    %c128_i32 = arith.constant 128 : i32
    %4 = arith.muli %arg1, %c128_i32 : i32
    %5 = tpu.iota {dimensions = array<i32: 1>} : vector<1x128xi32>
    %6 = vector.broadcast %4 : i32 to vector<1x128xi32>
    %7 = arith.addi %6, %5 : vector<1x128xi32>
    %c2_i32_0 = arith.constant 2 : i32
    %8 = vector.broadcast %c2_i32_0 : i32 to vector<2x1xi32>
    %9 = arith.cmpi slt, %3, %8 : vector<2x1xi32>
    %c256_i32 = arith.constant 256 : i32
    %10 = vector.broadcast %c256_i32 : i32 to vector<1x128xi32>
    %11 = arith.cmpi slt, %7, %10 : vector<1x128xi32>
    %12 = vector.broadcast %9 : vector<2x1xi1> to vector<2x128xi1>
    %13 = vector.broadcast %11 : vector<1x128xi1> to vector<2x128xi1>
    %14 = arith.andi %12, %13 : vector<2x128xi1>
    %c0 = arith.constant 0 : index
    %c0_1 = arith.constant 0 : index
    %15 = vector.load %arg4[%c0, %c0_1] : memref<2x128xi32, #tpu.memory_space<vmem>>, vector<2x128xi32>
    %c0_2 = arith.constant 0 : index
    %c0_3 = arith.constant 0 : index
    %c0_4 = arith.constant 0 : index
    %16 = vector.load %arg3[%c0_2, %c0_3, %c0_4] : memref<2x9x128xf32, #tpu.memory_space<vmem>>, vector<2x1x128xf32>
    %17 = vector.shape_cast %16 : vector<2x1x128xf32> to vector<2x128xf32>
    %c0_5 = arith.constant 0 : index
    %c1 = arith.constant 1 : index
    %c0_6 = arith.constant 0 : index
    %18 = vector.load %arg3[%c0_5, %c1, %c0_6] : memref<2x9x128xf32, #tpu.memory_space<vmem>>, vector<2x1x128xf32>
    %19 = vector.shape_cast %18 : vector<2x1x128xf32> to vector<2x128xf32>
    %20 = arith.maximumf %17, %19 : vector<2x128xf32>
    %c0_7 = arith.constant 0 : index
    %c2 = arith.constant 2 : index
    %c0_8 = arith.constant 0 : index
    %21 = vector.load %arg3[%c0_7, %c2, %c0_8] : memref<2x9x128xf32, #tpu.memory_space<vmem>>, vector<2x1x128xf32>
    %22 = vector.shape_cast %21 : vector<2x1x128xf32> to vector<2x128xf32>
    %23 = arith.maximumf %20, %22 : vector<2x128xf32>
    %c0_9 = arith.constant 0 : index
    %c3 = arith.constant 3 : index
    %c0_10 = arith.constant 0 : index
    %24 = vector.load %arg3[%c0_9, %c3, %c0_10] : memref<2x9x128xf32, #tpu.memory_space<vmem>>, vector<2x1x128xf32>
    %25 = vector.shape_cast %24 : vector<2x1x128xf32> to vector<2x128xf32>
    %26 = arith.maximumf %23, %25 : vector<2x128xf32>
    %c0_11 = arith.constant 0 : index
    %c4 = arith.constant 4 : index
    %c0_12 = arith.constant 0 : index
    %27 = vector.load %arg3[%c0_11, %c4, %c0_12] : memref<2x9x128xf32, #tpu.memory_space<vmem>>, vector<2x1x128xf32>
    %28 = vector.shape_cast %27 : vector<2x1x128xf32> to vector<2x128xf32>
    %29 = arith.maximumf %26, %28 : vector<2x128xf32>
    %c0_13 = arith.constant 0 : index
    %c5 = arith.constant 5 : index
    %c0_14 = arith.constant 0 : index
    %30 = vector.load %arg3[%c0_13, %c5, %c0_14] : memref<2x9x128xf32, #tpu.memory_space<vmem>>, vector<2x1x128xf32>
    %31 = vector.shape_cast %30 : vector<2x1x128xf32> to vector<2x128xf32>
    %32 = arith.maximumf %29, %31 : vector<2x128xf32>
    %c0_15 = arith.constant 0 : index
    %c6 = arith.constant 6 : index
    %c0_16 = arith.constant 0 : index
    %33 = vector.load %arg3[%c0_15, %c6, %c0_16] : memref<2x9x128xf32, #tpu.memory_space<vmem>>, vector<2x1x128xf32>
    %34 = vector.shape_cast %33 : vector<2x1x128xf32> to vector<2x128xf32>
    %35 = arith.maximumf %32, %34 : vector<2x128xf32>
    %c0_17 = arith.constant 0 : index
    %c7 = arith.constant 7 : index
    %c0_18 = arith.constant 0 : index
    %36 = vector.load %arg3[%c0_17, %c7, %c0_18] : memref<2x9x128xf32, #tpu.memory_space<vmem>>, vector<2x1x128xf32>
    %37 = vector.shape_cast %36 : vector<2x1x128xf32> to vector<2x128xf32>
    %38 = arith.maximumf %35, %37 : vector<2x128xf32>
    %c0_19 = arith.constant 0 : index
    %c8 = arith.constant 8 : index
    %c0_20 = arith.constant 0 : index
    %39 = vector.load %arg3[%c0_19, %c8, %c0_20] : memref<2x9x128xf32, #tpu.memory_space<vmem>>, vector<2x1x128xf32>
    %40 = vector.shape_cast %39 : vector<2x1x128xf32> to vector<2x128xf32>
    %41 = arith.maximumf %38, %40 : vector<2x128xf32>
    %cst = arith.constant 0.000000e+00 : f32
    %42 = vector.broadcast %cst : f32 to vector<2x128xf32>
    %cst_21 = arith.constant 0.000000e+00 : f32
    %43 = vector.broadcast %cst_21 : f32 to vector<2x128xf32>
    %cst_22 = arith.constant 0.000000e+00 : f32
    %44 = vector.broadcast %cst_22 : f32 to vector<2x128xf32>
    %c0_23 = arith.constant 0 : index
    %c0_24 = arith.constant 0 : index
    %c0_25 = arith.constant 0 : index
    %45 = vector.load %arg3[%c0_23, %c0_24, %c0_25] : memref<2x9x128xf32, #tpu.memory_space<vmem>>, vector<2x1x128xf32>
    %46 = vector.shape_cast %45 : vector<2x1x128xf32> to vector<2x128xf32>
    %47 = arith.subf %46, %41 : vector<2x128xf32>
    %48 = math.exp %47 : vector<2x128xf32>
    %49 = arith.addf %42, %48 : vector<2x128xf32>
    %c0_i32 = arith.constant 0 : i32
    %50 = vector.broadcast %c0_i32 : i32 to vector<2x128xi32>
    %51 = arith.cmpi eq, %15, %50 : vector<2x128xi32>
    %52 = arith.select %51, %47, %43 : vector<2x128xi1>, vector<2x128xf32>
    %cst_26 = arith.constant 1.000000e-01 : f32
    %53 = vector.broadcast %cst_26 : f32 to vector<2x128xf32>
    %54 = arith.select %51, %53, %44 : vector<2x128xi1>, vector<2x128xf32>
    %c0_27 = arith.constant 0 : index
    %c1_28 = arith.constant 1 : index
    %c0_29 = arith.constant 0 : index
    %55 = vector.load %arg3[%c0_27, %c1_28, %c0_29] : memref<2x9x128xf32, #tpu.memory_space<vmem>>, vector<2x1x128xf32>
    %56 = vector.shape_cast %55 : vector<2x1x128xf32> to vector<2x128xf32>
    %57 = arith.subf %56, %41 : vector<2x128xf32>
    %58 = math.exp %57 : vector<2x128xf32>
    %59 = arith.addf %49, %58 : vector<2x128xf32>
    %c1_i32 = arith.constant 1 : i32
    %60 = vector.broadcast %c1_i32 : i32 to vector<2x128xi32>
    %61 = arith.cmpi eq, %15, %60 : vector<2x128xi32>
    %62 = arith.select %61, %57, %52 : vector<2x128xi1>, vector<2x128xf32>
    %cst_30 = arith.constant 2.000000e-01 : f32
    %63 = vector.broadcast %cst_30 : f32 to vector<2x128xf32>
    %64 = arith.select %61, %63, %54 : vector<2x128xi1>, vector<2x128xf32>
    %c0_31 = arith.constant 0 : index
    %c2_32 = arith.constant 2 : index
    %c0_33 = arith.constant 0 : index
    %65 = vector.load %arg3[%c0_31, %c2_32, %c0_33] : memref<2x9x128xf32, #tpu.memory_space<vmem>>, vector<2x1x128xf32>
    %66 = vector.shape_cast %65 : vector<2x1x128xf32> to vector<2x128xf32>
    %67 = arith.subf %66, %41 : vector<2x128xf32>
    %68 = math.exp %67 : vector<2x128xf32>
    %69 = arith.addf %59, %68 : vector<2x128xf32>
    %c2_i32_34 = arith.constant 2 : i32
    %70 = vector.broadcast %c2_i32_34 : i32 to vector<2x128xi32>
    %71 = arith.cmpi eq, %15, %70 : vector<2x128xi32>
    %72 = arith.select %71, %67, %62 : vector<2x128xi1>, vector<2x128xf32>
    %cst_35 = arith.constant 3.000000e-01 : f32
    %73 = vector.broadcast %cst_35 : f32 to vector<2x128xf32>
    %74 = arith.select %71, %73, %64 : vector<2x128xi1>, vector<2x128xf32>
    %c0_36 = arith.constant 0 : index
    %c3_37 = arith.constant 3 : index
    %c0_38 = arith.constant 0 : index
    %75 = vector.load %arg3[%c0_36, %c3_37, %c0_38] : memref<2x9x128xf32, #tpu.memory_space<vmem>>, vector<2x1x128xf32>
    %76 = vector.shape_cast %75 : vector<2x1x128xf32> to vector<2x128xf32>
    %77 = arith.subf %76, %41 : vector<2x128xf32>
    %78 = math.exp %77 : vector<2x128xf32>
    %79 = arith.addf %69, %78 : vector<2x128xf32>
    %c3_i32 = arith.constant 3 : i32
    %80 = vector.broadcast %c3_i32 : i32 to vector<2x128xi32>
    %81 = arith.cmpi eq, %15, %80 : vector<2x128xi32>
    %82 = arith.select %81, %77, %72 : vector<2x128xi1>, vector<2x128xf32>
    %cst_39 = arith.constant 4.000000e-01 : f32
    %83 = vector.broadcast %cst_39 : f32 to vector<2x128xf32>
    %84 = arith.select %81, %83, %74 : vector<2x128xi1>, vector<2x128xf32>
    %c0_40 = arith.constant 0 : index
    %c4_41 = arith.constant 4 : index
    %c0_42 = arith.constant 0 : index
    %85 = vector.load %arg3[%c0_40, %c4_41, %c0_42] : memref<2x9x128xf32, #tpu.memory_space<vmem>>, vector<2x1x128xf32>
    %86 = vector.shape_cast %85 : vector<2x1x128xf32> to vector<2x128xf32>
    %87 = arith.subf %86, %41 : vector<2x128xf32>
    %88 = math.exp %87 : vector<2x128xf32>
    %89 = arith.addf %79, %88 : vector<2x128xf32>
    %c4_i32 = arith.constant 4 : i32
    %90 = vector.broadcast %c4_i32 : i32 to vector<2x128xi32>
    %91 = arith.cmpi eq, %15, %90 : vector<2x128xi32>
    %92 = arith.select %91, %87, %82 : vector<2x128xi1>, vector<2x128xf32>
    %cst_43 = arith.constant 5.000000e-01 : f32
    %93 = vector.broadcast %cst_43 : f32 to vector<2x128xf32>
    %94 = arith.select %91, %93, %84 : vector<2x128xi1>, vector<2x128xf32>
    %c0_44 = arith.constant 0 : index
    %c5_45 = arith.constant 5 : index
    %c0_46 = arith.constant 0 : index
    %95 = vector.load %arg3[%c0_44, %c5_45, %c0_46] : memref<2x9x128xf32, #tpu.memory_space<vmem>>, vector<2x1x128xf32>
    %96 = vector.shape_cast %95 : vector<2x1x128xf32> to vector<2x128xf32>
    %97 = arith.subf %96, %41 : vector<2x128xf32>
    %98 = math.exp %97 : vector<2x128xf32>
    %99 = arith.addf %89, %98 : vector<2x128xf32>
    %c5_i32 = arith.constant 5 : i32
    %100 = vector.broadcast %c5_i32 : i32 to vector<2x128xi32>
    %101 = arith.cmpi eq, %15, %100 : vector<2x128xi32>
    %102 = arith.select %101, %97, %92 : vector<2x128xi1>, vector<2x128xf32>
    %cst_47 = arith.constant 6.000000e-01 : f32
    %103 = vector.broadcast %cst_47 : f32 to vector<2x128xf32>
    %104 = arith.select %101, %103, %94 : vector<2x128xi1>, vector<2x128xf32>
    %c0_48 = arith.constant 0 : index
    %c6_49 = arith.constant 6 : index
    %c0_50 = arith.constant 0 : index
    %105 = vector.load %arg3[%c0_48, %c6_49, %c0_50] : memref<2x9x128xf32, #tpu.memory_space<vmem>>, vector<2x1x128xf32>
    %106 = vector.shape_cast %105 : vector<2x1x128xf32> to vector<2x128xf32>
    %107 = arith.subf %106, %41 : vector<2x128xf32>
    %108 = math.exp %107 : vector<2x128xf32>
    %109 = arith.addf %99, %108 : vector<2x128xf32>
    %c6_i32 = arith.constant 6 : i32
    %110 = vector.broadcast %c6_i32 : i32 to vector<2x128xi32>
    %111 = arith.cmpi eq, %15, %110 : vector<2x128xi32>
    %112 = arith.select %111, %107, %102 : vector<2x128xi1>, vector<2x128xf32>
    %cst_51 = arith.constant 0.699999988 : f32
    %113 = vector.broadcast %cst_51 : f32 to vector<2x128xf32>
    %114 = arith.select %111, %113, %104 : vector<2x128xi1>, vector<2x128xf32>
    %c0_52 = arith.constant 0 : index
    %c7_53 = arith.constant 7 : index
    %c0_54 = arith.constant 0 : index
    %115 = vector.load %arg3[%c0_52, %c7_53, %c0_54] : memref<2x9x128xf32, #tpu.memory_space<vmem>>, vector<2x1x128xf32>
    %116 = vector.shape_cast %115 : vector<2x1x128xf32> to vector<2x128xf32>
    %117 = arith.subf %116, %41 : vector<2x128xf32>
    %118 = math.exp %117 : vector<2x128xf32>
    %119 = arith.addf %109, %118 : vector<2x128xf32>
    %c7_i32 = arith.constant 7 : i32
    %120 = vector.broadcast %c7_i32 : i32 to vector<2x128xi32>
    %121 = arith.cmpi eq, %15, %120 : vector<2x128xi32>
    %122 = arith.select %121, %117, %112 : vector<2x128xi1>, vector<2x128xf32>
    %cst_55 = arith.constant 8.000000e-01 : f32
    %123 = vector.broadcast %cst_55 : f32 to vector<2x128xf32>
    %124 = arith.select %121, %123, %114 : vector<2x128xi1>, vector<2x128xf32>
    %c0_56 = arith.constant 0 : index
    %c8_57 = arith.constant 8 : index
    %c0_58 = arith.constant 0 : index
    %125 = vector.load %arg3[%c0_56, %c8_57, %c0_58] : memref<2x9x128xf32, #tpu.memory_space<vmem>>, vector<2x1x128xf32>
    %126 = vector.shape_cast %125 : vector<2x1x128xf32> to vector<2x128xf32>
    %127 = arith.subf %126, %41 : vector<2x128xf32>
    %128 = math.exp %127 : vector<2x128xf32>
    %129 = arith.addf %119, %128 : vector<2x128xf32>
    %c8_i32 = arith.constant 8 : i32
    %130 = vector.broadcast %c8_i32 : i32 to vector<2x128xi32>
    %131 = arith.cmpi eq, %15, %130 : vector<2x128xi32>
    %132 = arith.select %131, %127, %122 : vector<2x128xi1>, vector<2x128xf32>
    %cst_59 = arith.constant 0.900000035 : f32
    %133 = vector.broadcast %cst_59 : f32 to vector<2x128xf32>
    %134 = arith.select %131, %133, %124 : vector<2x128xi1>, vector<2x128xf32>
    %135 = math.log %129 : vector<2x128xf32>
    %136 = arith.subf %132, %135 : vector<2x128xf32>
    %137 = math.exp %136 : vector<2x128xf32>
    %cst_60 = arith.constant 1.000000e+00 : f32
    %138 = vector.broadcast %cst_60 : f32 to vector<2x128xf32>
    %139 = arith.subf %138, %137 : vector<2x128xf32>
    %cst_61 = arith.constant 0.000000e+00 : f32
    %140 = vector.broadcast %cst_61 : f32 to vector<2x128xf32>
    %141 = arith.maximumf %139, %140 : vector<2x128xf32>
    %142 = arith.mulf %141, %141 : vector<2x128xf32>
    %cst_62 = arith.constant 0.000000e+00 : f32
    %143 = vector.broadcast %cst_62 : f32 to vector<2x128xf32>
    %144 = arith.subf %143, %134 : vector<2x128xf32>
    %145 = arith.mulf %144, %142 : vector<2x128xf32>
    %146 = arith.mulf %145, %136 : vector<2x128xf32>
    %cst_63 = arith.constant 0.000000e+00 : f32
    %147 = vector.broadcast %cst_63 : f32 to vector<2x128xf32>
    %148 = arith.select %14, %146, %147 : vector<2x128xi1>, vector<2x128xf32>
    %cst_64 = arith.constant dense<0.000000e+00> : vector<128xf32>
    %149 = vector.multi_reduction <add>, %148, %cst_64 [0] : vector<2x128xf32> to vector<128xf32>
    %150 = vector.shape_cast %149 : vector<128xf32> to vector<1x128xf32>
    %c0_65 = arith.constant 0 : index
    %c0_66 = arith.constant 0 : index
    %151 = vector.load %arg2[%c0_65, %c0_66] : memref<4x128xf32, #tpu.memory_space<vmem>>, vector<4x128xf32>
    %c0_67 = arith.constant 0 : index
    %c0_68 = arith.constant 0 : index
    %c0_69 = arith.constant 0 : index
    %152 = vector.load %arg6[%c0_67, %c0_68, %c0_69] : memref<2x4x128xf32, #tpu.memory_space<vmem>>, vector<2x4x128xf32>
    %c0_70 = arith.constant 0 : index
    %c0_71 = arith.constant 0 : index
    %c0_72 = arith.constant 0 : index
    %153 = vector.load %arg5[%c0_70, %c0_71, %c0_72] : memref<2x4x128xf32, #tpu.memory_space<vmem>>, vector<2x4x128xf32>
    %c0_i32_73 = arith.constant 0 : i32
    %154 = vector.broadcast %c0_i32_73 : i32 to vector<2x128xi32>
    %155 = arith.cmpi sgt, %15, %154 : vector<2x128xi32>
    %156 = arith.andi %155, %14 : vector<2x128xi1>
    %157 = vector.extract_strided_slice %151 {offsets = [0, 0], sizes = [2, 128], strides = [1, 1]} : vector<4x128xf32> to vector<2x128xf32>
    %158 = vector.shape_cast %157 : vector<2x128xf32> to vector<1x2x128xf32>
    %159 = vector.extract_strided_slice %151 {offsets = [2, 0], sizes = [2, 128], strides = [1, 1]} : vector<4x128xf32> to vector<2x128xf32>
    %160 = vector.shape_cast %159 : vector<2x128xf32> to vector<1x2x128xf32>
    %161 = vector.extract_strided_slice %152 {offsets = [0, 0, 0], sizes = [2, 2, 128], strides = [1, 1, 1]} : vector<2x4x128xf32> to vector<2x2x128xf32>
    %162 = vector.broadcast %158 : vector<1x2x128xf32> to vector<2x2x128xf32>
    %163 = arith.subf %161, %162 : vector<2x2x128xf32>
    %cst_74 = arith.constant 1.000000e+01 : f32
    %164 = vector.broadcast %cst_74 : f32 to vector<2x2x128xf32>
    %165 = arith.mulf %164, %163 : vector<2x2x128xf32>
    %166 = vector.broadcast %160 : vector<1x2x128xf32> to vector<2x2x128xf32>
    %167 = arith.divf %165, %166 : vector<2x2x128xf32>
    %168 = vector.extract_strided_slice %152 {offsets = [0, 2, 0], sizes = [2, 2, 128], strides = [1, 1, 1]} : vector<2x4x128xf32> to vector<2x2x128xf32>
    %169 = vector.broadcast %160 : vector<1x2x128xf32> to vector<2x2x128xf32>
    %170 = arith.divf %168, %169 : vector<2x2x128xf32>
    %171 = vector.shape_cast %156 : vector<2x128xi1> to vector<2x1x128xi1>
    %cst_75 = arith.constant 1.000000e+00 : f32
    %172 = vector.shape_cast %171 : vector<2x1x128xi1> to vector<2x1x128xi1>
    %173 = vector.broadcast %172 : vector<2x1x128xi1> to vector<2x2x128xi1>
    %174 = vector.broadcast %cst_75 : f32 to vector<2x2x128xf32>
    %175 = arith.select %173, %170, %174 : vector<2x2x128xi1>, vector<2x2x128xf32>
    %176 = math.log %175 : vector<2x2x128xf32>
    %cst_76 = arith.constant 5.000000e+00 : f32
    %177 = vector.broadcast %cst_76 : f32 to vector<2x2x128xf32>
    %178 = arith.mulf %177, %176 : vector<2x2x128xf32>
    %179 = vector.extract_strided_slice %153 {offsets = [0, 0, 0], sizes = [2, 2, 128], strides = [1, 1, 1]} : vector<2x4x128xf32> to vector<2x2x128xf32>
    %180 = arith.subf %179, %167 : vector<2x2x128xf32>
    %181 = math.absf %180 : vector<2x2x128xf32>
    %cst_77 = arith.constant 1.000000e+00 : f32
    %182 = vector.broadcast %cst_77 : f32 to vector<2x2x128xf32>
    %183 = arith.cmpf olt, %181, %182 : vector<2x2x128xf32>
    %cst_78 = arith.constant 5.000000e-01 : f32
    %184 = vector.broadcast %cst_78 : f32 to vector<2x2x128xf32>
    %185 = arith.mulf %184, %180 : vector<2x2x128xf32>
    %186 = arith.mulf %185, %180 : vector<2x2x128xf32>
    %cst_79 = arith.constant 5.000000e-01 : f32
    %187 = vector.broadcast %cst_79 : f32 to vector<2x2x128xf32>
    %188 = arith.subf %181, %187 : vector<2x2x128xf32>
    %189 = arith.select %183, %186, %188 : vector<2x2x128xi1>, vector<2x2x128xf32>
    %cst_80 = arith.constant dense<0.000000e+00> : vector<2x128xf32>
    %190 = vector.multi_reduction <add>, %189, %cst_80 [1] : vector<2x2x128xf32> to vector<2x128xf32>
    %191 = vector.extract_strided_slice %153 {offsets = [0, 2, 0], sizes = [2, 2, 128], strides = [1, 1, 1]} : vector<2x4x128xf32> to vector<2x2x128xf32>
    %192 = arith.subf %191, %178 : vector<2x2x128xf32>
    %193 = math.absf %192 : vector<2x2x128xf32>
    %cst_81 = arith.constant 1.000000e+00 : f32
    %194 = vector.broadcast %cst_81 : f32 to vector<2x2x128xf32>
    %195 = arith.cmpf olt, %193, %194 : vector<2x2x128xf32>
    %cst_82 = arith.constant 5.000000e-01 : f32
    %196 = vector.broadcast %cst_82 : f32 to vector<2x2x128xf32>
    %197 = arith.mulf %196, %192 : vector<2x2x128xf32>
    %198 = arith.mulf %197, %192 : vector<2x2x128xf32>
    %cst_83 = arith.constant 5.000000e-01 : f32
    %199 = vector.broadcast %cst_83 : f32 to vector<2x2x128xf32>
    %200 = arith.subf %193, %199 : vector<2x2x128xf32>
    %201 = arith.select %195, %198, %200 : vector<2x2x128xi1>, vector<2x2x128xf32>
    %cst_84 = arith.constant dense<0.000000e+00> : vector<2x128xf32>
    %202 = vector.multi_reduction <add>, %201, %cst_84 [1] : vector<2x2x128xf32> to vector<2x128xf32>
    %203 = arith.addf %190, %202 : vector<2x128xf32>
    %cst_85 = arith.constant 0.000000e+00 : f32
    %204 = vector.broadcast %cst_85 : f32 to vector<2x128xf32>
    %205 = arith.select %156, %203, %204 : vector<2x128xi1>, vector<2x128xf32>
    %cst_86 = arith.constant dense<0.000000e+00> : vector<128xf32>
    %206 = vector.multi_reduction <add>, %205, %cst_86 [0] : vector<2x128xf32> to vector<128xf32>
    %207 = vector.shape_cast %206 : vector<128xf32> to vector<1x128xf32>
    %208 = arith.extui %156 : vector<2x128xi1> to vector<2x128xi32>
    %209 = arith.sitofp %208 : vector<2x128xi32> to vector<2x128xf32>
    %cst_87 = arith.constant dense<0.000000e+00> : vector<128xf32>
    %210 = vector.multi_reduction <add>, %209, %cst_87 [0] : vector<2x128xf32> to vector<128xf32>
    %211 = vector.shape_cast %210 : vector<128xf32> to vector<1x128xf32>
    %212 = tpu.concatenate %150, %207, %211 in 0 : vector<1x128xf32>, vector<1x128xf32>, vector<1x128xf32> -> vector<3x128xf32>
    %213 = vector.shape_cast %212 : vector<3x128xf32> to vector<1x1x3x128xf32>
    %c0_88 = arith.constant 0 : index
    %c0_89 = arith.constant 0 : index
    %c0_90 = arith.constant 0 : index
    %c0_91 = arith.constant 0 : index
    %214 = vector.load %arg7[%c0_88, %c0_89, %c0_90, %c0_91] : memref<1x1x3x128xf32, #tpu.memory_space<vmem>>, vector<1x1x3x128xf32>
    tpu.vector_store %arg7[%c0_88, %c0_89, %c0_90, %c0_91], %213 {strides = array<i32>} : memref<1x1x3x128xf32, #tpu.memory_space<vmem>>, vector<1x1x3x128xf32>,
    return
  }
  func.func @transform_0(%arg0: i32, %arg1: i32) -> (i32, i32) {
    %c0_i32 = arith.constant 0 : i32
    %c0_i32_0 = arith.constant 0 : i32
    return %c0_i32, %arg1 : i32, i32
  }
  func.func @transform_1(%arg0: i32, %arg1: i32) -> (i32, i32, i32) {
    %c0_i32 = arith.constant 0 : i32
    %c0_i32_0 = arith.constant 0 : i32
    return %arg0, %c0_i32, %arg1 : i32, i32, i32
  }
  func.func @transform_2(%arg0: i32, %arg1: i32) -> (i32, i32) {
    %c0_i32 = arith.constant 0 : i32
    return %arg0, %arg1 : i32, i32
  }
  func.func @transform_3(%arg0: i32, %arg1: i32) -> (i32, i32, i32) {
    %c0_i32 = arith.constant 0 : i32
    %c0_i32_0 = arith.constant 0 : i32
    return %arg0, %c0_i32, %arg1 : i32, i32, i32
  }
  func.func @transform_4(%arg0: i32, %arg1: i32) -> (i32, i32, i32) {
    %c0_i32 = arith.constant 0 : i32
    %c0_i32_0 = arith.constant 0 : i32
    return %arg0, %c0_i32, %arg1 : i32, i32, i32
  }
  func.func @transform_5(%arg0: i32, %arg1: i32) -> (i32, i32, i32, i32) {
    %c0_i32 = arith.constant 0 : i32
    %c0_i32_0 = arith.constant 0 : i32
    %c0_i32_1 = arith.constant 0 : i32
    return %arg0, %arg1, %c0_i32, %c0_i32_0 : i32, i32, i32, i32
  }
}

</mosaic_0001>

<llo_original>
// kernel: tpu_custom_call.1
$region0: #{tpu_custom_call.1}
  #allocation0 [shape = 'u32[]', space=smem, size = 0x4, offset = 0x4, fixed_abs, tag = 'smem constant byte address 0x4 - core index']
  #allocation1 [shape = 'u32[144,128]{1,0:T(1,128)}', space=vmem, size = 0x12000, scoped, tag = 'internal scratch']
  %s0 = inlined_call_operand.vmem [shape: f32[4,256], index: 0, kind: input, shape index: {}]
  %s1 = inlined_call_operand.vmem [shape: f32[2,9,256], index: 1, kind: input, shape index: {}]
  %s2 = inlined_call_operand.vmem [shape: s32[2,256], index: 2, kind: input, shape index: {}]
  %s3 = inlined_call_operand.vmem [shape: f32[2,4,256], index: 3, kind: input, shape index: {}]
  %s4 = inlined_call_operand.vmem [shape: f32[2,4,256], index: 4, kind: input, shape index: {}]
  %s5 = inlined_call_operand.vmem [shape: f32[1,2,3,128], index: 5, kind: output, shape index: {}]
  %s6 = sld [smem:[#allocation0]]
  $region173: #{tpu_custom_call.1} parent=0
    _
  %s8 = ssub.s32 1, %s6
  %s9 = scalar_select 0, %s8, %s6
  $region1: #{tpu_custom_call.1} parent=0
    #allocation2 [shape = 'u8[32768]{0}', space=vmem, size = 0x8000, scoped, tag = 'input window, operand 1']
    #allocation3 [shape = 'u8[8192]{0}', space=vmem, size = 0x2000, scoped, tag = 'input window, operand 3']
    #allocation4 [shape = 'u8[8192]{0}', space=vmem, size = 0x2000, scoped, tag = 'input window, operand 4']
    loop: start=0, step=1, limit=4
    $region2: #{tpu_custom_call.1} parent=1 // loop_pre_header
      _
    $region3: #{tpu_custom_call.1} parent=1 // loop_header
      %s11 = sphi 0, %s15
      %p12 = scmp.ge.s32.totalorder %s11, 4
      %s18 = sphi 0, %s30
      %s19 = sphi 0, %s26
      %s20 = sphi 0, %s18
      %s21 = sphi 0, %s19
      %s22 = sphi 0, %s20
      %s23 = sphi 0, %s21
      %s33 = sphi 0, %s35
      %s36 = sphi 0, %s33
      %s37 = sphi 0, %s36
      %s53 = sphi 0, %s37
      %s61 = sphi 0, %s63
      %s64 = sphi 0, %s61
      %s65 = sphi 0, %s64
      %s81 = sphi 0, %s65
      %s89 = sphi 0, %s91
      %s92 = sphi 0, %s89
      %s93 = sphi 0, %s92
      %s109 = sphi 0, %s93
      %s117 = sphi 0, %s119
      %s120 = sphi 0, %s117
      %s121 = sphi 0, %s120
      %s137 = sphi 0, %s121
      %s145 = sphi 0, %s147
      %s148 = sphi 0, %s145
      %s149 = sphi 0, %s148
      %s165 = sphi 0, %s149
      %s173 = sphi 0, %s175
      %s176 = sphi 0, %s173
      %s177 = sphi 0, %s176
      %s193 = sphi 0, %s177
    $region4: #{tpu_custom_call.1} parent=1 // loop_header_branch
      %14 = sbr.rel (%p12) target = $region8
    $region5: #{tpu_custom_call.1} parent=1 // loop_body
      %s16 = ssub.s32 %s11, 1
      %s17 = ssub.s32 %s11, 2
      %s24 = sadd.s32 1, %s19
      %p25 = scmp.ge.s32.totalorder %s24, 2
      %s26 = scalar_select %p25, 0, %s24
      %s27 = sadd.s32 1, %s18
      %s28 = scalar_select %p25, %s27, %s18
      %p29 = scmp.ge.s32.totalorder %s28, 1
      %s30 = scalar_select %p29, 0, %s28
      %s31 = ssub.s32 %s19, %s26
      %p32 = scmp.eq.s32.totalorder %s31, 0
      %s34 = sadd.s32 %s33, 1
      %s35 = scalar_select %p32, %s33, %s34
      %p38 = pneg %p32
      %p39 = scmp.eq.s32.totalorder %s11, 1
      %p40 = por %p38, %p39
      %p41 = scmp.ne.s32.totalorder %s33, %s36
      %p42 = scmp.eq.s32.totalorder %s11, 0
      %p43 = por %p41, %p42
      %p44 = scmp.ne.s32.totalorder %s33, %s36
      %p45 = scmp.eq.s32.totalorder %s16, 1
      %p46 = por %p44, %p45
      %p47 = scmp.ne.s32.totalorder %s36, %s37
      %p48 = scmp.eq.s32.totalorder %s16, 0
      %p49 = por %p47, %p48
      %p50 = scmp.ne.s32.totalorder %s36, %s37
      %p51 = scmp.eq.s32.totalorder %s17, 1
      %p52 = por %p50, %p51
      %p54 = scmp.ne.s32.totalorder %s37, %s53
      %p55 = scmp.eq.s32.totalorder %s17, 0
      %p56 = por %p54, %p55
      %s57 = ssub.s32 %s18, %s30
      %s58 = ssub.s32 %s19, %s26
      %s59 = sor.u32 %s57, %s58
      %p60 = scmp.eq.s32.totalorder %s59, 0
      %s62 = sadd.s32 %s61, 1
      %s63 = scalar_select %p60, %s61, %s62
      %p66 = pneg %p60
      %p67 = scmp.eq.s32.totalorder %s11, 1
      %p68 = por %p66, %p67
      %p69 = scmp.ne.s32.totalorder %s61, %s64
      %p70 = scmp.eq.s32.totalorder %s11, 0
      %p71 = por %p69, %p70
      %p72 = scmp.ne.s32.totalorder %s61, %s64
      %p73 = scmp.eq.s32.totalorder %s16, 1
      %p74 = por %p72, %p73
      %p75 = scmp.ne.s32.totalorder %s64, %s65
      %p76 = scmp.eq.s32.totalorder %s16, 0
      %p77 = por %p75, %p76
      %p78 = scmp.ne.s32.totalorder %s64, %s65
      %p79 = scmp.eq.s32.totalorder %s17, 1
      %p80 = por %p78, %p79
      %p82 = scmp.ne.s32.totalorder %s65, %s81
      %p83 = scmp.eq.s32.totalorder %s17, 0
      %p84 = por %p82, %p83
      %s85 = ssub.s32 %s18, %s30
      %s86 = ssub.s32 %s19, %s26
      %s87 = sor.u32 %s85, %s86
      %p88 = scmp.eq.s32.totalorder %s87, 0
      %s90 = sadd.s32 %s89, 1
      %s91 = scalar_select %p88, %s89, %s90
      %p94 = pneg %p88
      %p95 = scmp.eq.s32.totalorder %s11, 1
      %p96 = por %p94, %p95
      %p97 = scmp.ne.s32.totalorder %s89, %s92
      %p98 = scmp.eq.s32.totalorder %s11, 0
      %p99 = por %p97, %p98
      %p100 = scmp.ne.s32.totalorder %s89, %s92
      %p101 = scmp.eq.s32.totalorder %s16, 1
      %p102 = por %p100, %p101
      %p103 = scmp.ne.s32.totalorder %s92, %s93
      %p104 = scmp.eq.s32.totalorder %s16, 0
      %p105 = por %p103, %p104
      %p106 = scmp.ne.s32.totalorder %s92, %s93
      %p107 = scmp.eq.s32.totalorder %s17, 1
      %p108 = por %p106, %p107
      %p110 = scmp.ne.s32.totalorder %s93, %s109
      %p111 = scmp.eq.s32.totalorder %s17, 0
      %p112 = por %p110, %p111
      %s113 = ssub.s32 %s18, %s30
      %s114 = ssub.s32 %s19, %s26
      %s115 = sor.u32 %s113, %s114
      %p116 = scmp.eq.s32.totalorder %s115, 0
      %s118 = sadd.s32 %s117, 1
      %s119 = scalar_select %p116, %s117, %s118
      %p122 = pneg %p116
      %p123 = scmp.eq.s32.totalorder %s11, 1
      %p124 = por %p122, %p123
      %p125 = scmp.ne.s32.totalorder %s117, %s120
      %p126 = scmp.eq.s32.totalorder %s11, 0
      %p127 = por %p125, %p126
      %p128 = scmp.ne.s32.totalorder %s117, %s120
      %p129 = scmp.eq.s32.totalorder %s16, 1
      %p130 = por %p128, %p129
      %p131 = scmp.ne.s32.totalorder %s120, %s121
      %p132 = scmp.eq.s32.totalorder %s16, 0
      %p133 = por %p131, %p132
      %p134 = scmp.ne.s32.totalorder %s120, %s121
      %p135 = scmp.eq.s32.totalorder %s17, 1
      %p136 = por %p134, %p135
      %p138 = scmp.ne.s32.totalorder %s121, %s137
      %p139 = scmp.eq.s32.totalorder %s17, 0
      %p140 = por %p138, %p139
      %s141 = ssub.s32 %s18, %s30
      %s142 = ssub.s32 %s19, %s26
      %s143 = sor.u32 %s141, %s142
      %p144 = scmp.eq.s32.totalorder %s143, 0
      %s146 = sadd.s32 %s145, 1
      %s147 = scalar_select %p144, %s145, %s146
      %p150 = pneg %p144
      %p151 = scmp.eq.s32.totalorder %s11, 1
      %p152 = por %p150, %p151
      %p153 = scmp.ne.s32.totalorder %s145, %s148
      %p154 = scmp.eq.s32.totalorder %s11, 0
      %p155 = por %p153, %p154
      %p156 = scmp.ne.s32.totalorder %s145, %s148
      %p157 = scmp.eq.s32.totalorder %s16, 1
      %p158 = por %p156, %p157
      %p159 = scmp.ne.s32.totalorder %s148, %s149
      %p160 = scmp.eq.s32.totalorder %s16, 0
      %p161 = por %p159, %p160
      %p162 = scmp.ne.s32.totalorder %s148, %s149
      %p163 = scmp.eq.s32.totalorder %s17, 1
      %p164 = por %p162, %p163
      %p166 = scmp.ne.s32.totalorder %s149, %s165
      %p167 = scmp.eq.s32.totalorder %s17, 0
      %p168 = por %p166, %p167
      %s169 = ssub.s32 %s18, %s30
      %s170 = ssub.s32 %s19, %s26
      %s171 = sor.u32 %s169, %s170
      %p172 = scmp.eq.s32.totalorder %s171, 0
      %s174 = sadd.s32 %s173, 1
      %s175 = scalar_select %p172, %s173, %s174
      %p178 = pneg %p172
      %p179 = scmp.eq.s32.totalorder %s11, 1
      %p180 = por %p178, %p179
      %p181 = scmp.ne.s32.totalorder %s173, %s176
      %p182 = scmp.eq.s32.totalorder %s11, 0
      %p183 = por %p181, %p182
      %p184 = scmp.ne.s32.totalorder %s173, %s176
      %p185 = scmp.eq.s32.totalorder %s16, 1
      %p186 = por %p184, %p185
      %p187 = scmp.ne.s32.totalorder %s176, %s177
      %p188 = scmp.eq.s32.totalorder %s16, 0
      %p189 = por %p187, %p188
      %p190 = scmp.ne.s32.totalorder %s176, %s177
      %p191 = scmp.eq.s32.totalorder %s17, 1
      %p192 = por %p190, %p191
      %p194 = scmp.ne.s32.totalorder %s177, %s193
      %p195 = scmp.eq.s32.totalorder %s17, 0
      %p196 = por %p194, %p195
      %p197 = scmp.le.s32.totalorder 1, %s11
      %p198 = scmp.lt.s32.totalorder %s11, 3
      %p199 = pnand %p197, %p198
      %p200 = pneg %p199
      // Predicated region
      $region9: #{tpu_custom_call.1} parent=5 // pred_check
        _
      $region10: #{tpu_custom_call.1} parent=5 // pred_check_branch
        %202 = sbr.rel (%p199) target = $region12
      $region11: #{tpu_custom_call.1} parent=5 // pred_region
        %s203 = ssub.s32 %s11, 1
      $region12: #{tpu_custom_call.1} parent=5 // pred_fallthru
        _
      %p204 = scmp.lt.s32.totalorder %s11, 2
      // Predicated region
      $region13: #{tpu_custom_call.1} parent=5 // pred_check
        %p205 = pneg %p204
      $region14: #{tpu_custom_call.1} parent=5 // pred_check_branch
        %207 = sbr.rel (%p205) target = $region16
      $region15: #{tpu_custom_call.1} parent=5 // pred_region
        // Predicated region
        $region17: #{tpu_custom_call.1} parent=15 // pred_check
          %p208 = pneg %p43
        $region18: #{tpu_custom_call.1} parent=15 // pred_check_branch
          %210 = sbr.rel (%p208) target = $region20
        $region19: #{tpu_custom_call.1} parent=15 // pred_region
          %p211 = scmp.lt.s32.totalorder %s19, 1
          %s212 = scalar_select %p211, %s19, 1
          %s213 = smul.addr %s212, 4
          %s214 = scalar_lea.vmem %s0, %s213
        $region20: #{tpu_custom_call.1} parent=15 // pred_fallthru
          _
        // Predicated region
        $region21: #{tpu_custom_call.1} parent=15 // pred_check
          %p215 = pneg %p71
        $region22: #{tpu_custom_call.1} parent=15 // pred_check_branch
          %217 = sbr.rel (%p215) target = $region24
        $region23: #{tpu_custom_call.1} parent=15 // pred_region
          %s218 = sand.u32 %s61, 1
          %s219 = sand.u32 %s61, 1
          %s220 = smul.addr %s219, 32
          %s221 = scalar_lea.vmem [#allocation2], %s220
          %s222 = smul.u32 2, %s18
          %s223 = smul.addr %s222, 4
          %s224 = sadd.s32 %s19, %s223
          %s225 = smul.addr %s224, 8
          %s226 = scalar_lea.vmem %s1, %s225
          // Predicated region
          $region25: #{tpu_custom_call.1} parent=23 // pred_check
            _
          $region26: #{tpu_custom_call.1} parent=23 // pred_check_branch
            %228 = sbr.rel (0) target = $region28
          $region27: #{tpu_custom_call.1} parent=23 // pred_region
            // Predicated region
            $region29: #{tpu_custom_call.1} parent=27 // pred_check
              _
            $region30: #{tpu_custom_call.1} parent=27 // pred_check_branch
              %230 = sbr.rel (0) target = $region32
            $region31: #{tpu_custom_call.1} parent=27 // pred_region
              // Predicated region
              $region44: #{tpu_custom_call.1} parent=31 // pred_check
                _
              $region45: #{tpu_custom_call.1} parent=31 // pred_check_branch
                %251 = sbr.rel (0) target = $region47
              $region46: #{tpu_custom_call.1} parent=31 // pred_region
                loop: start=0, step=1, limit=1
                $region48: #{tpu_custom_call.1} parent=46 // loop_pre_header
                  _
                $region49: #{tpu_custom_call.1} parent=46 // loop_header
                  %s253 = sphi 0, %s257
                  %p254 = scmp.ge.s32.totalorder %s253, 1
                  %s258 = sphi %s226, %s226
                  %s259 = sphi %s221, %s221
                $region50: #{tpu_custom_call.1} parent=46 // loop_header_branch
                  %256 = sbr.rel (%p254) target = $region54
                $region51: #{tpu_custom_call.1} parent=46 // loop_body
                  %v260 = vld [vmem:[%s258] sm:$0xff]
                  %261 = vst [vmem:[%s259] sm:$0xff] %v260
                  %v262 = vld [vmem:[%s258 + $0x10] sm:$0xff]
                  %263 = vst [vmem:[%s259 + $0x8] sm:$0xff] %v262
                  %v264 = vld [vmem:[%s258 + $0x20] sm:$0xff]
                  %265 = vst [vmem:[%s259 + $0x10] sm:$0xff] %v264
                  %v266 = vld [vmem:[%s258 + $0x30] sm:$0xff]
                  %267 = vst [vmem:[%s259 + $0x18] sm:$0xff] %v266
                $region52: #{tpu_custom_call.1} parent=46 // loop_footer
                  %s257 = sadd.s32 1, %s253
                $region53: #{tpu_custom_call.1} parent=46 // loop_footer_branch
                  %252 = sbr.rel target = $region49
                $region54: #{tpu_custom_call.1} parent=46 // loop_exit
                  _
              $region47: #{tpu_custom_call.1} parent=31 // pred_fallthru
                _
              // Predicated region
              $region55: #{tpu_custom_call.1} parent=31 // pred_check
                _
              $region56: #{tpu_custom_call.1} parent=31 // pred_check_branch
                %269 = sbr.rel target = $region58
              $region57: #{tpu_custom_call.1} parent=31 // pred_region
                _
              $region58: #{tpu_custom_call.1} parent=31 // pred_fallthru
                _
            $region32: #{tpu_custom_call.1} parent=27 // pred_fallthru
              _
            // Predicated region
            $region33: #{tpu_custom_call.1} parent=27 // pred_check
              _
            $region34: #{tpu_custom_call.1} parent=27 // pred_check_branch
              %232 = sbr.rel target = $region36
            $region35: #{tpu_custom_call.1} parent=27 // pred_region
              loop: start=0, step=1, limit=1
              $region37: #{tpu_custom_call.1} parent=35 // loop_pre_header
                _
              $region38: #{tpu_custom_call.1} parent=35 // loop_header
                %s235 = sphi 0, %s239
                %p236 = scmp.ge.s32.totalorder %s235, 1
                %s240 = sphi %s226, %s226
                %s241 = sphi %s221, %s221
              $region39: #{tpu_custom_call.1} parent=35 // loop_header_branch
                %238 = sbr.rel (%p236) target = $region43
              $region40: #{tpu_custom_call.1} parent=35 // loop_body
                %v242 = vld [vmem:[%s240] sm:$0xff]
                %243 = vst [vmem:[%s241] sm:$0xff] %v242
                %v244 = vld [vmem:[%s240 + $0x10] sm:$0xff]
                %245 = vst [vmem:[%s241 + $0x8] sm:$0xff] %v244
                %v246 = vld [vmem:[%s240 + $0x20] sm:$0xff]
                %247 = vst [vmem:[%s241 + $0x10] sm:$0xff] %v246
                %v248 = vld [vmem:[%s240 + $0x30] sm:$0xff]
                %249 = vst [vmem:[%s241 + $0x18] sm:$0xff] %v248
              $region41: #{tpu_custom_call.1} parent=35 // loop_footer
                %s239 = sadd.s32 1, %s235
              $region42: #{tpu_custom_call.1} parent=35 // loop_footer_branch
                %234 = sbr.rel target = $region38
              $region43: #{tpu_custom_call.1} parent=35 // loop_exit
                _
            $region36: #{tpu_custom_call.1} parent=27 // pred_fallthru
              _
          $region28: #{tpu_custom_call.1} parent=23 // pred_fallthru
            _
          %270 = vnop
        $region24: #{tpu_custom_call.1} parent=15 // pred_fallthru
          _
        // Predicated region
        $region59: #{tpu_custom_call.1} parent=15 // pred_check
          %p271 = pneg %p99
        $region60: #{tpu_custom_call.1} parent=15 // pred_check_branch
          %273 = sbr.rel (%p271) target = $region62
        $region61: #{tpu_custom_call.1} parent=15 // pred_region
          %p274 = scmp.lt.s32.totalorder %s18, 0
          %s275 = scalar_select %p274, %s18, 0
          %p276 = scmp.lt.s32.totalorder %s19, 1
          %s277 = scalar_select %p276, %s19, 1
          %s278 = smul.addr %s275, 2
          %s279 = sadd.s32 %s277, %s278
          %s280 = smul.addr %s279, 2
          %s281 = scalar_lea.vmem %s2, %s280
        $region62: #{tpu_custom_call.1} parent=15 // pred_fallthru
          _
        // Predicated region
        $region63: #{tpu_custom_call.1} parent=15 // pred_check
          %p282 = pneg %p127
        $region64: #{tpu_custom_call.1} parent=15 // pred_check_branch
          %284 = sbr.rel (%p282) target = $region66
        $region65: #{tpu_custom_call.1} parent=15 // pred_region
          %s285 = sand.u32 %s117, 1
          %s286 = sand.u32 %s117, 1
          %s287 = smul.addr %s286, 8
          %s288 = scalar_lea.vmem [#allocation3], %s287
          %s289 = smul.u32 2, %s18
          %s290 = smul.addr %s289, 2
          %s291 = sadd.s32 %s19, %s290
          %s292 = smul.addr %s291, 4
          %s293 = scalar_lea.vmem %s3, %s292
          // Predicated region
          $region67: #{tpu_custom_call.1} parent=65 // pred_check
            _
          $region68: #{tpu_custom_call.1} parent=65 // pred_check_branch
            %295 = sbr.rel (0) target = $region70
          $region69: #{tpu_custom_call.1} parent=65 // pred_region
            // Predicated region
            $region71: #{tpu_custom_call.1} parent=69 // pred_check
              _
            $region72: #{tpu_custom_call.1} parent=69 // pred_check_branch
              %297 = sbr.rel target = $region74
            $region73: #{tpu_custom_call.1} parent=69 // pred_region
              // Predicated region
              $region86: #{tpu_custom_call.1} parent=73 // pred_check
                _
              $region87: #{tpu_custom_call.1} parent=73 // pred_check_branch
                %314 = sbr.rel (0) target = $region89
              $region88: #{tpu_custom_call.1} parent=73 // pred_region
                loop: start=0, step=1, limit=1
                $region90: #{tpu_custom_call.1} parent=88 // loop_pre_header
                  _
                $region91: #{tpu_custom_call.1} parent=88 // loop_header
                  %s316 = sphi 0, %s320
                  %p317 = scmp.ge.s32.totalorder %s316, 1
                  %s321 = sphi %s293, %s293
                  %s322 = sphi %s288, %s288
                $region92: #{tpu_custom_call.1} parent=88 // loop_header_branch
                  %319 = sbr.rel (%p317) target = $region96
                $region93: #{tpu_custom_call.1} parent=88 // loop_body
                  _
                $region94: #{tpu_custom_call.1} parent=88 // loop_footer
                  %s320 = sadd.s32 1, %s316
                $region95: #{tpu_custom_call.1} parent=88 // loop_footer_branch
                  %315 = sbr.rel target = $region91
                $region96: #{tpu_custom_call.1} parent=88 // loop_exit
                  _
                loop: start=0, step=1, limit=1
                $region97: #{tpu_custom_call.1} parent=88 // loop_pre_header
                  _
                $region98: #{tpu_custom_call.1} parent=88 // loop_header
                  %s325 = sphi 0, %s329
                  %p326 = scmp.ge.s32.totalorder %s325, 1
                  %s330 = sphi %s293, %s293
                  %s331 = sphi %s288, %s288
                $region99: #{tpu_custom_call.1} parent=88 // loop_header_branch
                  %328 = sbr.rel (%p326) target = $region103
                $region100: #{tpu_custom_call.1} parent=88 // loop_body
                  %v332 = vld [vmem:[%s330] sm:$0xf]
                  %333 = vst [vmem:[%s331] sm:$0xf] %v332
                  %v334 = vld [vmem:[%s330 + $0x8] sm:$0xf]
                  %335 = vst [vmem:[%s331 + $0x4] sm:$0xf] %v334
                $region101: #{tpu_custom_call.1} parent=88 // loop_footer
                  %s329 = sadd.s32 1, %s325
                $region102: #{tpu_custom_call.1} parent=88 // loop_footer_branch
                  %324 = sbr.rel target = $region98
                $region103: #{tpu_custom_call.1} parent=88 // loop_exit
                  _
              $region89: #{tpu_custom_call.1} parent=73 // pred_fallthru
                _
            $region74: #{tpu_custom_call.1} parent=69 // pred_fallthru
              _
            // Predicated region
            $region75: #{tpu_custom_call.1} parent=69 // pred_check
              _
            $region76: #{tpu_custom_call.1} parent=69 // pred_check_branch
              %299 = sbr.rel (0) target = $region78
            $region77: #{tpu_custom_call.1} parent=69 // pred_region
              loop: start=0, step=1, limit=1
              $region79: #{tpu_custom_call.1} parent=77 // loop_pre_header
                _
              $region80: #{tpu_custom_call.1} parent=77 // loop_header
                %s302 = sphi 0, %s306
                %p303 = scmp.ge.s32.totalorder %s302, 1
                %s307 = sphi %s293, %s293
                %s308 = sphi %s288, %s288
              $region81: #{tpu_custom_call.1} parent=77 // loop_header_branch
                %305 = sbr.rel (%p303) target = $region85
              $region82: #{tpu_custom_call.1} parent=77 // loop_body
                %v309 = vld [vmem:[%s307] sm:$0xf]
                %310 = vst [vmem:[%s308] sm:$0xf] %v309
                %v311 = vld [vmem:[%s307 + $0x8] sm:$0xf]
                %312 = vst [vmem:[%s308 + $0x4] sm:$0xf] %v311
              $region83: #{tpu_custom_call.1} parent=77 // loop_footer
                %s306 = sadd.s32 1, %s302
              $region84: #{tpu_custom_call.1} parent=77 // loop_footer_branch
                %301 = sbr.rel target = $region80
              $region85: #{tpu_custom_call.1} parent=77 // loop_exit
                _
            $region78: #{tpu_custom_call.1} parent=69 // pred_fallthru
              _
          $region70: #{tpu_custom_call.1} parent=65 // pred_fallthru
            _
          %336 = vnop
        $region66: #{tpu_custom_call.1} parent=15 // pred_fallthru
          _
        // Predicated region
        $region104: #{tpu_custom_call.1} parent=15 // pred_check
          %p337 = pneg %p155
        $region105: #{tpu_custom_call.1} parent=15 // pred_check_branch
          %339 = sbr.rel (%p337) target = $region107
        $region106: #{tpu_custom_call.1} parent=15 // pred_region
          %s340 = sand.u32 %s145, 1
          %s341 = sand.u32 %s145, 1
          %s342 = smul.addr %s341, 8
          %s343 = scalar_lea.vmem [#allocation4], %s342
          %s344 = smul.u32 2, %s18
          %s345 = smul.addr %s344, 2
          %s346 = sadd.s32 %s19, %s345
          %s347 = smul.addr %s346, 4
          %s348 = scalar_lea.vmem %s4, %s347
          // Predicated region
          $region108: #{tpu_custom_call.1} parent=106 // pred_check
            _
          $region109: #{tpu_custom_call.1} parent=106 // pred_check_branch
            %350 = sbr.rel (0) target = $region111
          $region110: #{tpu_custom_call.1} parent=106 // pred_region
            // Predicated region
            $region112: #{tpu_custom_call.1} parent=110 // pred_check
              _
            $region113: #{tpu_custom_call.1} parent=110 // pred_check_branch
              %352 = sbr.rel target = $region115
            $region114: #{tpu_custom_call.1} parent=110 // pred_region
              // Predicated region
              $region127: #{tpu_custom_call.1} parent=114 // pred_check
                _
              $region128: #{tpu_custom_call.1} parent=114 // pred_check_branch
                %369 = sbr.rel (0) target = $region130
              $region129: #{tpu_custom_call.1} parent=114 // pred_region
                loop: start=0, step=1, limit=1
                $region131: #{tpu_custom_call.1} parent=129 // loop_pre_header
                  _
                $region132: #{tpu_custom_call.1} parent=129 // loop_header
                  %s371 = sphi 0, %s375
                  %p372 = scmp.ge.s32.totalorder %s371, 1
                  %s376 = sphi %s348, %s348
                  %s377 = sphi %s343, %s343
                $region133: #{tpu_custom_call.1} parent=129 // loop_header_branch
                  %374 = sbr.rel (%p372) target = $region137
                $region134: #{tpu_custom_call.1} parent=129 // loop_body
                  _
                $region135: #{tpu_custom_call.1} parent=129 // loop_footer
                  %s375 = sadd.s32 1, %s371
                $region136: #{tpu_custom_call.1} parent=129 // loop_footer_branch
                  %370 = sbr.rel target = $region132
                $region137: #{tpu_custom_call.1} parent=129 // loop_exit
                  _
                loop: start=0, step=1, limit=1
                $region138: #{tpu_custom_call.1} parent=129 // loop_pre_header
                  _
                $region139: #{tpu_custom_call.1} parent=129 // loop_header
                  %s380 = sphi 0, %s384
                  %p381 = scmp.ge.s32.totalorder %s380, 1
                  %s385 = sphi %s348, %s348
                  %s386 = sphi %s343, %s343
                $region140: #{tpu_custom_call.1} parent=129 // loop_header_branch
                  %383 = sbr.rel (%p381) target = $region144
                $region141: #{tpu_custom_call.1} parent=129 // loop_body
                  %v387 = vld [vmem:[%s385] sm:$0xf]
                  %388 = vst [vmem:[%s386] sm:$0xf] %v387
                  %v389 = vld [vmem:[%s385 + $0x8] sm:$0xf]
                  %390 = vst [vmem:[%s386 + $0x4] sm:$0xf] %v389
                $region142: #{tpu_custom_call.1} parent=129 // loop_footer
                  %s384 = sadd.s32 1, %s380
                $region143: #{tpu_custom_call.1} parent=129 // loop_footer_branch
                  %379 = sbr.rel target = $region139
                $region144: #{tpu_custom_call.1} parent=129 // loop_exit
                  _
              $region130: #{tpu_custom_call.1} parent=114 // pred_fallthru
                _
            $region115: #{tpu_custom_call.1} parent=110 // pred_fallthru
              _
            // Predicated region
            $region116: #{tpu_custom_call.1} parent=110 // pred_check
              _
            $region117: #{tpu_custom_call.1} parent=110 // pred_check_branch
              %354 = sbr.rel (0) target = $region119
            $region118: #{tpu_custom_call.1} parent=110 // pred_region
              loop: start=0, step=1, limit=1
              $region120: #{tpu_custom_call.1} parent=118 // loop_pre_header
                _
              $region121: #{tpu_custom_call.1} parent=118 // loop_header
                %s357 = sphi 0, %s361
                %p358 = scmp.ge.s32.totalorder %s357, 1
                %s362 = sphi %s348, %s348
                %s363 = sphi %s343, %s343
              $region122: #{tpu_custom_call.1} parent=118 // loop_header_branch
                %360 = sbr.rel (%p358) target = $region126
              $region123: #{tpu_custom_call.1} parent=118 // loop_body
                %v364 = vld [vmem:[%s362] sm:$0xf]
                %365 = vst [vmem:[%s363] sm:$0xf] %v364
                %v366 = vld [vmem:[%s362 + $0x8] sm:$0xf]
                %367 = vst [vmem:[%s363 + $0x4] sm:$0xf] %v366
              $region124: #{tpu_custom_call.1} parent=118 // loop_footer
                %s361 = sadd.s32 1, %s357
              $region125: #{tpu_custom_call.1} parent=118 // loop_footer_branch
                %356 = sbr.rel target = $region121
              $region126: #{tpu_custom_call.1} parent=118 // loop_exit
                _
            $region119: #{tpu_custom_call.1} parent=110 // pred_fallthru
              _
          $region111: #{tpu_custom_call.1} parent=106 // pred_fallthru
            _
          %391 = vnop
        $region107: #{tpu_custom_call.1} parent=15 // pred_fallthru
          _
      $region16: #{tpu_custom_call.1} parent=5 // pred_fallthru
        _
      %p392 = scmp.le.s32.totalorder 1, %s11
      %p393 = scmp.lt.s32.totalorder %s11, 3
      %p394 = pnand %p392, %p393
      %p395 = pneg %p394
      // Predicated region
      $region145: #{tpu_custom_call.1} parent=5 // pred_check
        _
      $region146: #{tpu_custom_call.1} parent=5 // pred_check_branch
        %397 = sbr.rel (%p394) target = $region148
      $region147: #{tpu_custom_call.1} parent=5 // pred_region
        %s398 = ssub.s32 %s11, 1
        %s399 = sand.u32 %s64, 1
        %s400 = sand.u32 %s64, 1
        %s401 = smul.addr %s400, 32
        %s402 = scalar_lea.vmem [#allocation2], %s401
        // Predicated region
        $region149: #{tpu_custom_call.1} parent=147 // pred_check
          %p403 = pneg %p77
        $region150: #{tpu_custom_call.1} parent=147 // pred_check_branch
          %405 = sbr.rel (%p403) target = $region152
        $region151: #{tpu_custom_call.1} parent=147 // pred_region
          _
        $region152: #{tpu_custom_call.1} parent=147 // pred_fallthru
          _
        %s406 = sand.u32 %s120, 1
        %s407 = sand.u32 %s120, 1
        %s408 = smul.addr %s407, 8
        %s409 = scalar_lea.vmem [#allocation3], %s408
        // Predicated region
        $region153: #{tpu_custom_call.1} parent=147 // pred_check
          %p410 = pneg %p133
        $region154: #{tpu_custom_call.1} parent=147 // pred_check_branch
          %412 = sbr.rel (%p410) target = $region156
        $region155: #{tpu_custom_call.1} parent=147 // pred_region
          _
        $region156: #{tpu_custom_call.1} parent=147 // pred_fallthru
          _
        %s413 = sand.u32 %s148, 1
        %s414 = sand.u32 %s148, 1
        %s415 = smul.addr %s414, 8
        %s416 = scalar_lea.vmem [#allocation4], %s415
        // Predicated region
        $region157: #{tpu_custom_call.1} parent=147 // pred_check
          %p417 = pneg %p161
        $region158: #{tpu_custom_call.1} parent=147 // pred_check_branch
          %419 = sbr.rel (%p417) target = $region160
        $region159: #{tpu_custom_call.1} parent=147 // pred_region
          _
        $region160: #{tpu_custom_call.1} parent=147 // pred_fallthru
          _
        %p420 = scmp.lt.s32.totalorder %s21, 1
        %s421 = scalar_select %p420, %s21, 1
        %s422 = smul.addr %s421, 4
        %s423 = scalar_lea.vmem %s0, %s422
        %p424 = pneg %p49
        %p425 = pneg %p46
        %s426 = sand.u32 %s64, 1
        %s427 = sand.u32 %s64, 1
        %s428 = smul.addr %s427, 32
        %s429 = scalar_lea.vmem [#allocation2], %s428
        %p430 = pneg %p77
        %p431 = pneg %p74
        %p432 = scmp.lt.s32.totalorder %s20, 0
        %s433 = scalar_select %p432, %s20, 0
        %p434 = scmp.lt.s32.totalorder %s21, 1
        %s435 = scalar_select %p434, %s21, 1
        %s436 = smul.addr %s433, 2
        %s437 = sadd.s32 %s435, %s436
        %s438 = smul.addr %s437, 2
        %s439 = scalar_lea.vmem %s2, %s438
        %p440 = pneg %p105
        %p441 = pneg %p102
        %s442 = sand.u32 %s120, 1
        %s443 = sand.u32 %s120, 1
        %s444 = smul.addr %s443, 8
        %s445 = scalar_lea.vmem [#allocation3], %s444
        %p446 = pneg %p133
        %p447 = pneg %p130
        %s448 = sand.u32 %s148, 1
        %s449 = sand.u32 %s148, 1
        %s450 = smul.addr %s449, 8
        %s451 = scalar_lea.vmem [#allocation4], %s450
        %p452 = pneg %p161
        %p453 = pneg %p158
        %p454 = pneg %p189
        %p455 = pneg %p186
        %p456 = scmp.lt.s32.totalorder %s20, 0
        %s457 = scalar_select %p456, %s20, 0
        %p458 = scmp.lt.s32.totalorder %s21, 1
        %s459 = scalar_select %p458, %s21, 1
        %s460 = smul.addr %s457, 2
        %s461 = sadd.s32 %s459, %s460
        %s462 = smul.addr %s461, 4
        %s463 = scalar_lea.vmem %s5, %s462
        %p464 = scmp.lt.s32.totalorder %s21, 1
        %s465 = scalar_select %p464, %s21, 1
        %s466 = smul.addr %s465, 4
        %s467 = scalar_lea.vmem %s0, %s466
        %s468 = smul.u32 2, %s20
        %p469 = scmp.lt.s32.totalorder %s20, 0
        %s470 = scalar_select %p469, %s20, 0
        %p471 = scmp.lt.s32.totalorder %s21, 1
        %s472 = scalar_select %p471, %s21, 1
        %s473 = smul.addr %s470, 2
        %s474 = sadd.s32 %s472, %s473
        %s475 = smul.addr %s474, 2
        %s476 = scalar_lea.vmem %s2, %s475
        %s477 = smul.u32 2, %s20
        %s478 = smul.u32 2, %s20
        %p479 = scmp.lt.s32.totalorder %s20, 0
        %s480 = scalar_select %p479, %s20, 0
        %p481 = scmp.lt.s32.totalorder %s21, 1
        %s482 = scalar_select %p481, %s21, 1
        %s483 = smul.addr %s480, 2
        %s484 = sadd.s32 %s482, %s483
        %s485 = smul.addr %s484, 4
        %s486 = scalar_lea.vmem %s5, %s485
        %s487 = smul.u32 %s20, 2
        %v488 = vlaneseq
        %v489 = vshrl.u32 %v488, 7
        %v490 = vstv %s487
        %v491 = vadd.s32 %v490, %v489
        %s492 = smul.u32 %s21, 128
        %v493 = vlaneseq
        %v494 = vand.u32 %v493, 127
        %v495 = vstv %s492
        %v496 = vadd.s32 %v495, %v494
        %vm497 = vcmp.lt.s32.totalorder %v491, 2
        %vm498 = vcmp.lt.s32.totalorder %v496, 256
        %v499 = vsel %vm497, 1, 0
        %vm500 = vcmp.eq.s32.totalorder %v499, 1
        %v501 = vsel %vm498, 1, 0
        %vm502 = vcmp.eq.s32.totalorder %v501, 1
        %vm503 = vmand %vm500, %vm502
        %v504 = vld [vmem:[%s476] sm:$0x3]
        %v505 = vld [vmem:[%s402] sm:$0x1]
        %v506 = vld [vmem:[%s402 + $0x10] sm:$0x1]
        %v507 = vld [vmem:[%s402 + $0x1] sm:$0x1]
        %v508 = vld [vmem:[%s402 + $0x11] sm:$0x1]
        %v509 = vmax.f32 %v505, %v507
        %v510 = vmax.f32 %v506, %v508
        %v511 = vld [vmem:[%s402 + $0x2] sm:$0x1]
        %v512 = vld [vmem:[%s402 + $0x12] sm:$0x1]
        %v513 = vmax.f32 %v509, %v511
        %v514 = vmax.f32 %v510, %v512
        %v515 = vld [vmem:[%s402 + $0x3] sm:$0x1]
        %v516 = vld [vmem:[%s402 + $0x13] sm:$0x1]
        %v517 = vmax.f32 %v513, %v515
        %v518 = vmax.f32 %v514, %v516
        %v519 = vld [vmem:[%s402 + $0x4] sm:$0x1]
        %v520 = vld [vmem:[%s402 + $0x14] sm:$0x1]
        %v521 = vmax.f32 %v517, %v519
        %v522 = vmax.f32 %v518, %v520
        %v523 = vld [vmem:[%s402 + $0x5] sm:$0x1]
        %v524 = vld [vmem:[%s402 + $0x15] sm:$0x1]
        %v525 = vmax.f32 %v521, %v523
        %v526 = vmax.f32 %v522, %v524
        %v527 = vld [vmem:[%s402 + $0x6] sm:$0x1]
        %v528 = vld [vmem:[%s402 + $0x16] sm:$0x1]
        %v529 = vmax.f32 %v525, %v527
        %v530 = vmax.f32 %v526, %v528
        %v531 = vld [vmem:[%s402 + $0x7] sm:$0x1]
        %v532 = vld [vmem:[%s402 + $0x17] sm:$0x1]
        %v533 = vmax.f32 %v529, %v531
        %v534 = vmax.f32 %v530, %v532
        %v535 = vld [vmem:[%s402 + $0x8] sm:$0x1]
        %v536 = vld [vmem:[%s402 + $0x18] sm:$0x1]
        %v537 = vmax.f32 %v533, %v535
        %v538 = vmax.f32 %v534, %v536
        %v539 = vsub.f32 %v505, %v537
        %v540 = vsub.f32 %v506, %v538
        %v541 = vmul.f32 %v539, 1.442695
        %v542 = vpow.pop %v541
        %v543 = vmul.f32 %v540, 1.442695
        %v544 = vpow.pop %v543
        %v545 = vadd.f32 %v542, 0.0
        %v546 = vadd.f32 %v544, 0.0
        %vm547 = vcmp.eq.s32.totalorder %v504, 0
        %v550 = vrot.slane %v540, 7
        %vm551 = vcmask 1041409
        %v552 = vsel %vm551, %v550, %v539
        %v554 = vsel %vm547, %v552, 0.0
        %v555 = vsel %vm547, 0.1, 0.0
        %v556 = vsub.f32 %v507, %v537
        %v557 = vsub.f32 %v508, %v538
        %v558 = vmul.f32 %v556, 1.442695
        %v559 = vpow.pop %v558
        %v560 = vmul.f32 %v557, 1.442695
        %v561 = vpow.pop %v560
        %v562 = vadd.f32 %v545, %v559
        %v563 = vadd.f32 %v546, %v561
        %vm564 = vcmp.eq.s32.totalorder %v504, 1
        %v567 = vrot.slane %v557, 7
        %v568 = vsel %vm551, %v567, %v556
        %v570 = vsel %vm564, %v568, %v554
        %v571 = vsel %vm564, 0.2, %v555
        %v572 = vsub.f32 %v511, %v537
        %v573 = vsub.f32 %v512, %v538
        %v574 = vmul.f32 %v572, 1.442695
        %v575 = vpow.pop %v574
        %v576 = vmul.f32 %v573, 1.442695
        %v577 = vpow.pop %v576
        %v578 = vadd.f32 %v562, %v575
        %v579 = vadd.f32 %v563, %v577
        %vm580 = vcmp.eq.s32.totalorder %v504, 2
        %v583 = vrot.slane %v573, 7
        %v584 = vsel %vm551, %v583, %v572
        %v586 = vsel %vm580, %v584, %v570
        %v587 = vsel %vm580, 0.3, %v571
        %v588 = vsub.f32 %v515, %v537
        %v589 = vsub.f32 %v516, %v538
        %v590 = vmul.f32 %v588, 1.442695
        %v591 = vpow.pop %v590
        %v592 = vmul.f32 %v589, 1.442695
        %v593 = vpow.pop %v592
        %v594 = vadd.f32 %v578, %v591
        %v595 = vadd.f32 %v579, %v593
        %vm596 = vcmp.eq.s32.totalorder %v504, 3
        %v599 = vrot.slane %v589, 7
        %v600 = vsel %vm551, %v599, %v588
        %v602 = vsel %vm596, %v600, %v586
        %v603 = vsel %vm596, 0.4, %v587
        %v604 = vsub.f32 %v519, %v537
        %v605 = vsub.f32 %v520, %v538
        %v606 = vmul.f32 %v604, 1.442695
        %v607 = vpow.pop %v606
        %v608 = vmul.f32 %v605, 1.442695
        %v609 = vpow.pop %v608
        %v610 = vadd.f32 %v594, %v607
        %v611 = vadd.f32 %v595, %v609
        %vm612 = vcmp.eq.s32.totalorder %v504, 4
        %v615 = vrot.slane %v605, 7
        %v616 = vsel %vm551, %v615, %v604
        %v618 = vsel %vm612, %v616, %v602
        %v619 = vsel %vm612, 0.5, %v603
        %v620 = vsub.f32 %v523, %v537
        %v621 = vsub.f32 %v524, %v538
        %v622 = vmul.f32 %v620, 1.442695
        %v623 = vpow.pop %v622
        %v624 = vmul.f32 %v621, 1.442695
        %v625 = vpow.pop %v624
        %v626 = vadd.f32 %v610, %v623
        %v627 = vadd.f32 %v611, %v625
        %vm628 = vcmp.eq.s32.totalorder %v504, 5
        %v631 = vrot.slane %v621, 7
        %v632 = vsel %vm551, %v631, %v620
        %v634 = vsel %vm628, %v632, %v618
        %v635 = vsel %vm628, 0.6, %v619
        %v636 = vsub.f32 %v527, %v537
        %v637 = vsub.f32 %v528, %v538
        %v638 = vmul.f32 %v636, 1.442695
        %v639 = vpow.pop %v638
        %v640 = vmul.f32 %v637, 1.442695
        %v641 = vpow.pop %v640
        %v642 = vadd.f32 %v626, %v639
        %v643 = vadd.f32 %v627, %v641
        %vm644 = vcmp.eq.s32.totalorder %v504, 6
        %v647 = vrot.slane %v637, 7
        %v648 = vsel %vm551, %v647, %v636
        %v650 = vsel %vm644, %v648, %v634
        %v651 = vsel %vm644, 0.7, %v635
        %v652 = vsub.f32 %v531, %v537
        %v653 = vsub.f32 %v532, %v538
        %v654 = vmul.f32 %v652, 1.442695
        %v655 = vpow.pop %v654
        %v656 = vmul.f32 %v653, 1.442695
        %v657 = vpow.pop %v656
        %v658 = vadd.f32 %v642, %v655
        %v659 = vadd.f32 %v643, %v657
        %vm660 = vcmp.eq.s32.totalorder %v504, 7
        %v663 = vrot.slane %v653, 7
        %v664 = vsel %vm551, %v663, %v652
        %v666 = vsel %vm660, %v664, %v650
        %v667 = vsel %vm660, 0.8, %v651
        %v668 = vsub.f32 %v535, %v537
        %v669 = vsub.f32 %v536, %v538
        %v670 = vmul.f32 %v668, 1.442695
        %v671 = vpow.pop %v670
        %v672 = vmul.f32 %v669, 1.442695
        %v673 = vpow.pop %v672
        %v674 = vadd.f32 %v658, %v671
        %v675 = vadd.f32 %v659, %v673
        %vm676 = vcmp.eq.s32.totalorder %v504, 8
        %v679 = vrot.slane %v669, 7
        %v680 = vsel %vm551, %v679, %v668
        %v682 = vsel %vm676, %v680, %v666
        %v683 = vsel %vm676, 0.90000004, %v667
        %v684 = vlog2.pop %v674
        %v685 = vmul.f32 %v684, 0.6931472
        %v686 = vlog2.pop %v675
        %v687 = vmul.f32 %v686, 0.6931472
        %v690 = vrot.slane %v687, 7
        %v691 = vsel %vm551, %v690, %v685
        %v693 = vsub.f32 %v682, %v691
        %v694 = vmul.f32 %v693, 1.442695
        %v695 = vpow.pop %v694
        %v696 = vsub.f32 1.0, %v695
        %v697 = vmax.f32 %v696, 0.0
        %v698 = vmul.f32 %v697, %v697
        %v699 = vsub.f32 0.0, %v683
        %v700 = vmul.f32 %v699, %v698
        %v701 = vmul.f32 %v700, %v693
        %v702 = vsel %vm503, %v701, 0.0
        %vm703 = vcmask 1041408
        %v704 = vsel %vm703, %v702, 0.0
        %v705 = vrot.slane %v704, 4
        %v706 = vadd.f32 %v704, %v705
        %v707 = vrot.slane %v706, 2
        %v708 = vadd.f32 %v706, %v707
        %v709 = vrot.slane %v708, 1
        %v710 = vadd.f32 %v708, %v709
        %v711 = vld [vmem:[%s467] sm:$0xf]
        %v712 = vld [vmem:[%s416] sm:$0xf]
        %v713 = vld [vmem:[%s416 + $0x4] sm:$0xf]
        %v714 = vld [vmem:[%s409] sm:$0xf]
        %v715 = vld [vmem:[%s409 + $0x4] sm:$0xf]
        %vm716 = vcmp.gt.s32.totalorder %v504, 0
        %vm717 = vmand %vm716, %vm503
        %v718 = vsub.f32 %v712, %v711
        %v719 = vsub.f32 %v713, %v711
        %v720 = vmul.f32 %v718, 10.0
        %v721 = vmul.f32 %v719, 10.0
        %v723 = vrot.slane %v711, 2
        %v725 = vrcp.pop %v723
        %v726 = vmul.f32 %v720, %v725
        %v727 = vmul.f32 %v721, %v725
        %v728 = vrcp.pop %v711
        %v729 = vmul.f32 %v712, %v728
        %v730 = vmul.f32 %v713, %v728
        %v731 = vsel %vm717, 1, 0
        %v733 = vunpack.c.l.s4 1966171168
        %v734 = vunpack.c.0.s8 %v733
        %v735 = vlaneseq
        %v736 = vshrl.u32 %v735, 7
        %v737 = vsub.s32 %v734, %v736
        %v738 = vrot.slane %v731, %v737
        %v739 = vcombine.high %v738, %v738
        %v741 = vunpack.c.l.s4 1966171168
        %v742 = vunpack.c.0.s8 %v741
        %v743 = vlaneseq
        %v744 = vshrl.u32 %v743, 7
        %v745 = vsub.s32 %v742, %v744
        %v746 = vrot.slane %v738, %v745
        %v748 = vunpack.c.l.s4 1966171168
        %v749 = vunpack.c.0.s8 %v748
        %v750 = vlaneseq
        %v751 = vshrl.u32 %v750, 7
        %v752 = vsub.s32 %v749, %v751
        %v753 = vrot.slane %v739, %v752
        %vm754 = vcmp.ne.s32.totalorder %v746, 0
        %vm755 = vcmp.ne.s32.totalorder %v753, 0
        %v756 = vsel %vm754, 1, 0
        %v757 = vsel %vm755, 1, 0
        %v758 = vlaneseq
        %v759 = vshrl.u32 %v758, 7
        %v760 = vsub.s32 0, %v759
        %v761 = vrot.slane %v756, %v760
        %v762 = vlaneseq
        %v763 = vshrl.u32 %v762, 7
        %v764 = vsub.s32 0, %v763
        %v765 = vrot.slane %v757, %v764
        %vm766 = vcmp.eq.s32.totalorder %v761, 1
        %vm767 = vcmp.eq.s32.totalorder %v765, 1
        %v768 = vsel %vm766, %v729, 1.0
        %v769 = vsel %vm767, %v730, 1.0
        %v770 = vlog2.pop %v768
        %v771 = vmul.f32 %v770, 0.6931472
        %v772 = vlog2.pop %v769
        %v773 = vmul.f32 %v772, 0.6931472
        %v774 = vmul.f32 %v771, 5.0
        %v775 = vmul.f32 %v773, 5.0
        %v776 = vsub.f32 %v714, %v726
        %v777 = vsub.f32 %v715, %v727
        %v778 = vand.u32 2147483647, %v776
        %v779 = vand.u32 2147483647, %v777
        %vm780 = vcmp.lt.f32.partialorder %v778, 1.0
        %vm781 = vcmp.lt.f32.partialorder %v779, 1.0
        %v782 = vmul.f32 %v776, 0.5
        %v783 = vmul.f32 %v777, 0.5
        %v784 = vmul.f32 %v782, %v776
        %v785 = vmul.f32 %v783, %v777
        %v786 = vsub.f32 %v778, 0.5
        %v787 = vsub.f32 %v779, 0.5
        %v788 = vsel %vm780, %v784, %v786
        %v789 = vsel %vm781, %v785, %v787
        %v790 = vsel %vm703, %v788, 0.0
        %v791 = vrot.slane %v790, 4
        %v792 = vadd.f32 %v790, %v791
        %v793 = vrot.slane %v792, 2
        %v794 = vadd.f32 %v792, %v793
        %v795 = vrot.slane %v794, 1
        %v796 = vadd.f32 %v794, %v795
        %v797 = vsel %vm703, %v789, 0.0
        %v798 = vrot.slane %v797, 4
        %v799 = vadd.f32 %v797, %v798
        %v800 = vrot.slane %v799, 2
        %v801 = vadd.f32 %v799, %v800
        %v802 = vrot.slane %v801, 1
        %v803 = vadd.f32 %v801, %v802
        %v804 = vsub.f32 %v714, %v774
        %v805 = vsub.f32 %v715, %v775
        %v806 = vand.u32 2147483647, %v804
        %v807 = vand.u32 2147483647, %v805
        %vm808 = vcmp.lt.f32.partialorder %v806, 1.0
        %vm809 = vcmp.lt.f32.partialorder %v807, 1.0
        %v810 = vmul.f32 %v804, 0.5
        %v811 = vmul.f32 %v805, 0.5
        %v812 = vmul.f32 %v810, %v804
        %v813 = vmul.f32 %v811, %v805
        %v814 = vsub.f32 %v806, 0.5
        %v815 = vsub.f32 %v807, 0.5
        %v816 = vsel %vm808, %v812, %v814
        %v817 = vsel %vm809, %v813, %v815
        %v820 = vrot.slane %v816, 2
        %v821 = vrot.slane %v817, 2
        %v824 = vsel %vm703, %v820, 0.0
        %v825 = vrot.slane %v824, 4
        %v826 = vadd.f32 %v824, %v825
        %v827 = vrot.slane %v826, 2
        %v828 = vadd.f32 %v826, %v827
        %v829 = vrot.slane %v828, 1
        %v830 = vadd.f32 %v828, %v829
        %v831 = vsel %vm703, %v821, 0.0
        %v832 = vrot.slane %v831, 4
        %v833 = vadd.f32 %v831, %v832
        %v834 = vrot.slane %v833, 2
        %v835 = vadd.f32 %v833, %v834
        %v836 = vrot.slane %v835, 1
        %v837 = vadd.f32 %v835, %v836
        %v838 = vadd.f32 %v796, %v830
        %v839 = vadd.f32 %v803, %v837
        %v842 = vsel %vm551, %v839, %v838
        %v844 = vsel %vm717, %v842, 0.0
        %v845 = vsel %vm703, %v844, 0.0
        %v846 = vrot.slane %v845, 4
        %v847 = vadd.f32 %v845, %v846
        %v848 = vrot.slane %v847, 2
        %v849 = vadd.f32 %v847, %v848
        %v850 = vrot.slane %v849, 1
        %v851 = vadd.f32 %v849, %v850
        %v852 = vcvt.s32.f32 %v731
        %v853 = vsel %vm703, %v852, 0.0
        %v854 = vrot.slane %v853, 4
        %v855 = vadd.f32 %v853, %v854
        %v856 = vrot.slane %v855, 2
        %v857 = vadd.f32 %v855, %v856
        %v858 = vrot.slane %v857, 1
        %v859 = vadd.f32 %v857, %v858
        %vm860 = vcmask 1040384
        %v861 = vsel %vm860, %v710, %v851
        %v862 = vsel %vm703, %v861, %v859
        %863 = vst [vmem:[%s486] sm:$0x7] %v862
        %p864 = scmp.lt.s32.totalorder %s20, 0
        %s865 = scalar_select %p864, %s20, 0
        %p866 = scmp.lt.s32.totalorder %s21, 1
        %s867 = scalar_select %p866, %s21, 1
        %s868 = smul.addr %s865, 2
        %s869 = sadd.s32 %s867, %s868
        %s870 = smul.addr %s869, 4
        %s871 = scalar_lea.vmem %s5, %s870
        // Predicated region
        $region161: #{tpu_custom_call.1} parent=147 // pred_check
          %p872 = pneg %p186
        $region162: #{tpu_custom_call.1} parent=147 // pred_check_branch
          %874 = sbr.rel (%p872) target = $region164
        $region163: #{tpu_custom_call.1} parent=147 // pred_region
          _
        $region164: #{tpu_custom_call.1} parent=147 // pred_fallthru
          _
      $region148: #{tpu_custom_call.1} parent=5 // pred_fallthru
        _
      %p875 = scmp.le.s32.totalorder 2, %s11
      // Predicated region
      $region165: #{tpu_custom_call.1} parent=5 // pred_check
        %p876 = pneg %p875
      $region166: #{tpu_custom_call.1} parent=5 // pred_check_branch
        %878 = sbr.rel (%p876) target = $region168
      $region167: #{tpu_custom_call.1} parent=5 // pred_region
        %s879 = ssub.s32 %s11, 2
        // Predicated region
        $region169: #{tpu_custom_call.1} parent=167 // pred_check
          %p880 = pneg %p192
        $region170: #{tpu_custom_call.1} parent=167 // pred_check_branch
          %882 = sbr.rel (%p880) target = $region172
        $region171: #{tpu_custom_call.1} parent=167 // pred_region
          %p883 = scmp.lt.s32.totalorder %s22, 0
          %s884 = scalar_select %p883, %s22, 0
          %p885 = scmp.lt.s32.totalorder %s23, 1
          %s886 = scalar_select %p885, %s23, 1
          %s887 = smul.addr %s884, 2
          %s888 = sadd.s32 %s886, %s887
          %s889 = smul.addr %s888, 4
          %s890 = scalar_lea.vmem %s5, %s889
        $region172: #{tpu_custom_call.1} parent=167 // pred_fallthru
          _
      $region168: #{tpu_custom_call.1} parent=5 // pred_fallthru
        _
    $region6: #{tpu_custom_call.1} parent=1 // loop_footer
      %s15 = sadd.s32 1, %s11
    $region7: #{tpu_custom_call.1} parent=1 // loop_footer_branch
      %10 = sbr.rel target = $region3
    $region8: #{tpu_custom_call.1} parent=1 // loop_exit
      _

</llo_original>
